<compile_context>
chip_gen: v5e
topology: v5e:2x2
jax: 0.10.0
libtpu: 0.0.40
codegen_flags: <defaults>
</compile_context>

<pallas_src>
import jax
import jax.numpy as jnp
from jax.experimental import pallas as pl
from jax.experimental.pallas import tpu as pltpu


def _mlp_kernel(x_ref, w1_ref, t1_ref, w2_ref, t2_ref, w3_ref, b3_ref, o_ref):
    # x: (TB, E) f32 tile -> bf16 for the MXU. Weights are bf16 with the BN
    # scale pre-folded; shifts/bias are f32. Matmuls accumulate in f32 and the
    # epilogue (add + relu) stays in f32 on the VPU (v5e has no bf16 VPU path).
    x = x_ref[...].astype(jnp.bfloat16)

    # Linear1 + folded BatchNorm1 + ReLU
    h1 = jnp.dot(x, w1_ref[...], preferred_element_type=jnp.float32)
    h1 = jnp.maximum(h1 + t1_ref[...], 0.0)

    # Linear2 + folded BatchNorm2 + ReLU
    h2 = jnp.dot(h1.astype(jnp.bfloat16), w2_ref[...],
                 preferred_element_type=jnp.float32)
    h2 = jnp.maximum(h2 + t2_ref[...], 0.0)

    # Linear3 (output head)
    out = jnp.dot(h2.astype(jnp.bfloat16), w3_ref[...],
                  preferred_element_type=jnp.float32) + b3_ref[...]
    o_ref[...] = out.astype(o_ref.dtype)


def _tensorcores_per_chip():
    try:
        kind = jax.devices()[0].device_kind.lower()
    except Exception:
        return 1
    return 2 if ("v7" in kind or "7x" in kind) else 1


def _pick_batch_tile(n):
    cores = _tensorcores_per_chip()
    if cores > 1 and (n // cores) >= 8 and n % (8 * cores) == 0:
        return n // cores      # v7x: >=2 grid steps so both TensorCores get work
    return n                   # v5e/v6e: single TC -> one grid step, no pipeline


def mlp_graph_pooling_forward(x, kparams, *, batch_tile=None):
    """x: [N, emb_dim] float32.  kparams: output of prepare_kernel_params()."""
    n, emb = x.shape
    h1 = kparams["w1"].shape[1]          # 2 * emb_dim
    h2 = kparams["w2"].shape[1]          # 4 * emb_dim
    out_dim = kparams["w3"].shape[1]

    if batch_tile is None:
        batch_tile = _pick_batch_tile(n)
    batch_tile = min(batch_tile, n)
    assert n % batch_tile == 0 and (batch_tile % 8 == 0 or batch_tile == n)

    grid = (n // batch_tile,)

    def const_spec(shape):
        # grid-invariant operand (weights / per-feature vectors)
        return pl.BlockSpec(shape, lambda i: (0, 0))

    flops = 2 * n * (emb * h1 + h1 * h2 + h2 * out_dim)
    bytes_accessed = (
        n * emb * 4                                   # x (f32)
        + (emb * h1 + h1 * h2 + h2 * out_dim) * 2     # bf16 weights
        + (h1 + h2 + out_dim) * 4                     # f32 shifts / bias
        + n * out_dim * 4)                            # f32 output (unpadded)

    out = pl.pallas_call(
        _mlp_kernel,
        out_shape=jax.ShapeDtypeStruct((n, out_dim), jnp.float32),
        grid_spec=pltpu.PrefetchScalarGridSpec(
            num_scalar_prefetch=0,
            grid=grid,
            in_specs=[
                pl.BlockSpec((batch_tile, emb), lambda i: (i, 0)),  # x tile
                const_spec((emb, h1)),                              # W1 (scale folded)
                const_spec((1, h1)),                                # shift1 (+bias)
                const_spec((h1, h2)),                               # W2 (scale folded)
                const_spec((1, h2)),                                # shift2 (+bias)
                const_spec((h2, out_dim)),                          # W3
                const_spec((1, out_dim)),                           # b3
            ],
            out_specs=pl.BlockSpec((batch_tile, out_dim), lambda i: (i, 0)),
        ),
        compiler_params=pltpu.CompilerParams(
            dimension_semantics=("parallel",),
            vmem_limit_bytes=32 * 1024 * 1024),
        cost_estimate=pl.CostEstimate(
            flops=flops, transcendentals=0, bytes_accessed=bytes_accessed),
    )(x, kparams["w1"], kparams["t1"], kparams["w2"], kparams["t2"],
      kparams["w3"], kparams["b3"])

    return out


def make_params(key, emb_dim, out_dim, eps=1e-5):
    """Deterministic synthetic f32 parameters (reference layout):
    Linear (w, b) and BatchNorm running-stat affines as (scale, shift)."""
    h1, h2 = 2 * emb_dim, 4 * emb_dim
    ks = jax.random.split(key, 14)

    def lin(kw, kb, fan_in, fan_out):
        bound = 1.0 / jnp.sqrt(fan_in)
        w = jax.random.uniform(kw, (fan_in, fan_out), jnp.float32, -bound, bound)
        b = jax.random.uniform(kb, (1, fan_out), jnp.float32, -bound, bound)
        return w, b

    w1, b1 = lin(ks[0], ks[1], emb_dim, h1)
    w2, b2 = lin(ks[2], ks[3], h1, h2)
    w3, b3 = lin(ks[4], ks[5], h2, out_dim)

    def bn(kg, kb, km, kv, width):
        gamma = 1.0 + 0.1 * jax.random.normal(kg, (1, width), jnp.float32)
        beta = 0.1 * jax.random.normal(kb, (1, width), jnp.float32)
        rmean = 0.1 * jax.random.normal(km, (1, width), jnp.float32)
        rvar = 1.0 + 0.1 * jax.random.uniform(kv, (1, width), jnp.float32)
        scale = gamma / jnp.sqrt(rvar + eps)
        shift = beta - rmean * scale
        return scale, shift

    sc1, sh1 = bn(ks[6], ks[7], ks[8], ks[9], h1)
    sc2, sh2 = bn(ks[10], ks[11], ks[12], ks[13], h2)

    return dict(
        w1=w1, b1=b1, scale1=sc1, shift1=sh1,
        w2=w2, b2=b2, scale2=sc2, shift2=sh2,
        w3=w3, b3=b3,
    )


def prepare_kernel_params(params):
    """One-time kernel-side prep (hoisted out of the per-call wrapper):
    fold BN scale into the Linear weight columns and the Linear bias through
    the BN affine (both exact, done in f32), then cast matmul operands to
    bf16.  Call once; reuse the result across forward calls."""
    w1 = (params["w1"] * params["scale1"]).astype(jnp.bfloat16)
    t1 = params["shift1"] + params["b1"] * params["scale1"]
    w2 = (params["w2"] * params["scale2"]).astype(jnp.bfloat16)
    t2 = params["shift2"] + params["b2"] * params["scale2"]
    w3 = params["w3"].astype(jnp.bfloat16)
    b3 = params["b3"]
    return dict(w1=w1, t1=t1, w2=w2, t2=t2, w3=w3, b3=b3)


def reference_forward(x, params):
    h = jnp.maximum((x @ params["w1"] + params["b1"]) * params["scale1"]
                    + params["shift1"], 0.0)
    h = jnp.maximum((h @ params["w2"] + params["b2"]) * params["scale2"]
                    + params["shift2"], 0.0)
    return h @ params["w3"] + params["b3"]


if __name__ == "__main__":
    emb_dim, out_dim = 32, 16
    n = 512  # number of pooled graph embeddings fed to the MLP head

    key = jax.random.PRNGKey(0)
    kx, kp = jax.random.split(key)
    x = jax.random.normal(kx, (n, emb_dim), jnp.float32)

    params = make_params(kp, emb_dim, out_dim)     # reference (f32) parameters
    kparams = prepare_kernel_params(params)        # one-time kernel param prep

    out = mlp_graph_pooling_forward(x, kparams)
    out = jax.block_until_ready(out)

    ref = reference_forward(x, params)
    assert out.shape == (n, out_dim)
    # bf16 matmul operands (f32 accumulation) -> loosened tolerance vs f32 reference
    assert jnp.allclose(out, ref, atol=5e-2, rtol=5e-2), "mismatch vs reference"
    print("KERNEL_OK")
</pallas_src>

<mosaic_0001>
module attributes {stable_mosaic.version = 11 : i64} {
  func.func @_mlp_kernel(%arg0: i32, %arg1: memref<512x32xf32, #tpu.memory_space<vmem>>, %arg2: memref<32x64xbf16, #tpu.memory_space<vmem>>, %arg3: memref<1x64xf32, #tpu.memory_space<vmem>>, %arg4: memref<64x128xbf16, #tpu.memory_space<vmem>>, %arg5: memref<1x128xf32, #tpu.memory_space<vmem>>, %arg6: memref<128x16xbf16, #tpu.memory_space<vmem>>, %arg7: memref<1x16xf32, #tpu.memory_space<vmem>>, %arg8: memref<512x16xf32, #tpu.memory_space<vmem>>) attributes {dimension_semantics = [#tpu.dimension_semantics<parallel>], iteration_bounds = array<i64: 1>, scalar_prefetch = 0 : i64, scratch_operands = 0 : i64, tpu.core_type = #tpu.core_type<tc>, window_params = [{transform_indices = @transform_0, window_bounds = array<i64: 512, 32>}, {pipeline_mode = #tpu.pipeline_mode<synchronous>, transform_indices = @transform_1, window_bounds = array<i64: 32, 64>}, {pipeline_mode = #tpu.pipeline_mode<synchronous>, transform_indices = @transform_2, window_bounds = array<i64: 1, 64>}, {pipeline_mode = #tpu.pipeline_mode<synchronous>, transform_indices = @transform_3, window_bounds = array<i64: 64, 128>}, {pipeline_mode = #tpu.pipeline_mode<synchronous>, transform_indices = @transform_4, window_bounds = array<i64: 1, 128>}, {pipeline_mode = #tpu.pipeline_mode<synchronous>, transform_indices = @transform_5, window_bounds = array<i64: 128, 16>}, {pipeline_mode = #tpu.pipeline_mode<synchronous>, transform_indices = @transform_6, window_bounds = array<i64: 1, 16>}, {transform_indices = @transform_7, window_bounds = array<i64: 512, 16>}]} {
    %c0 = arith.constant 0 : index
    %c0_0 = arith.constant 0 : index
    %0 = vector.load %arg1[%c0, %c0_0] : memref<512x32xf32, #tpu.memory_space<vmem>>, vector<512x32xf32>
    %1 = arith.truncf %0 : vector<512x32xf32> to vector<512x32xbf16>
    %c0_1 = arith.constant 0 : index
    %c0_2 = arith.constant 0 : index
    %2 = vector.load %arg2[%c0_1, %c0_2] : memref<32x64xbf16, #tpu.memory_space<vmem>>, vector<32x64xbf16>
    %cst = arith.constant dense<0.000000e+00> : vector<512x64xf32>
    %3 = tpu.matmul %1, %2, %cst {dimension_numbers = #tpu.dot_dimension_numbers<[1], [0], [0], [1], [0, 0, 1, 1], [], []>} : vector<512x32xbf16>, vector<32x64xbf16>, vector<512x64xf32> -> vector<512x64xf32>
    %c0_3 = arith.constant 0 : index
    %c0_4 = arith.constant 0 : index
    %4 = vector.load %arg3[%c0_3, %c0_4] : memref<1x64xf32, #tpu.memory_space<vmem>>, vector<1x64xf32>
    %5 = vector.broadcast %4 : vector<1x64xf32> to vector<512x64xf32>
    %6 = arith.addf %3, %5 : vector<512x64xf32>
    %cst_5 = arith.constant 0.000000e+00 : f32
    %7 = vector.broadcast %cst_5 : f32 to vector<512x64xf32>
    %8 = arith.maximumf %6, %7 : vector<512x64xf32>
    %9 = arith.truncf %8 : vector<512x64xf32> to vector<512x64xbf16>
    %c0_6 = arith.constant 0 : index
    %c0_7 = arith.constant 0 : index
    %10 = vector.load %arg4[%c0_6, %c0_7] : memref<64x128xbf16, #tpu.memory_space<vmem>>, vector<64x128xbf16>
    %cst_8 = arith.constant dense<0.000000e+00> : vector<512x128xf32>
    %11 = tpu.matmul %9, %10, %cst_8 {dimension_numbers = #tpu.dot_dimension_numbers<[1], [0], [0], [1], [0, 0, 1, 1], [], []>} : vector<512x64xbf16>, vector<64x128xbf16>, vector<512x128xf32> -> vector<512x128xf32>
    %c0_9 = arith.constant 0 : index
    %c0_10 = arith.constant 0 : index
    %12 = vector.load %arg5[%c0_9, %c0_10] : memref<1x128xf32, #tpu.memory_space<vmem>>, vector<1x128xf32>
    %13 = vector.broadcast %12 : vector<1x128xf32> to vector<512x128xf32>
    %14 = arith.addf %11, %13 : vector<512x128xf32>
    %cst_11 = arith.constant 0.000000e+00 : f32
    %15 = vector.broadcast %cst_11 : f32 to vector<512x128xf32>
    %16 = arith.maximumf %14, %15 : vector<512x128xf32>
    %17 = arith.truncf %16 : vector<512x128xf32> to vector<512x128xbf16>
    %c0_12 = arith.constant 0 : index
    %c0_13 = arith.constant 0 : index
    %18 = vector.load %arg6[%c0_12, %c0_13] : memref<128x16xbf16, #tpu.memory_space<vmem>>, vector<128x16xbf16>
    %cst_14 = arith.constant dense<0.000000e+00> : vector<512x16xf32>
    %19 = tpu.matmul %17, %18, %cst_14 {dimension_numbers = #tpu.dot_dimension_numbers<[1], [0], [0], [1], [0, 0, 1, 1], [], []>} : vector<512x128xbf16>, vector<128x16xbf16>, vector<512x16xf32> -> vector<512x16xf32>
    %c0_15 = arith.constant 0 : index
    %c0_16 = arith.constant 0 : index
    %20 = vector.load %arg7[%c0_15, %c0_16] : memref<1x16xf32, #tpu.memory_space<vmem>>, vector<1x16xf32>
    %21 = vector.broadcast %20 : vector<1x16xf32> to vector<512x16xf32>
    %22 = arith.addf %19, %21 : vector<512x16xf32>
    %c0_17 = arith.constant 0 : index
    %c0_18 = arith.constant 0 : index
    %23 = vector.load %arg8[%c0_17, %c0_18] : memref<512x16xf32, #tpu.memory_space<vmem>>, vector<512x16xf32>
    tpu.vector_store %arg8[%c0_17, %c0_18], %22 {strides = array<i32>} : memref<512x16xf32, #tpu.memory_space<vmem>>, vector<512x16xf32>,
    return
  }
  func.func @transform_0(%arg0: i32) -> (i32, i32) {
    %c0_i32 = arith.constant 0 : i32
    %c0_i32_0 = arith.constant 0 : i32
    return %arg0, %c0_i32 : i32, i32
  }
  func.func @transform_1(%arg0: i32) -> (i32, i32) {
    %c0_i32 = arith.constant 0 : i32
    %c0_i32_0 = arith.constant 0 : i32
    %c0_i32_1 = arith.constant 0 : i32
    return %c0_i32, %c0_i32_0 : i32, i32
  }
  func.func @transform_2(%arg0: i32) -> (i32, i32) {
    %c0_i32 = arith.constant 0 : i32
    %c0_i32_0 = arith.constant 0 : i32
    %c0_i32_1 = arith.constant 0 : i32
    return %c0_i32, %c0_i32_0 : i32, i32
  }
  func.func @transform_3(%arg0: i32) -> (i32, i32) {
    %c0_i32 = arith.constant 0 : i32
    %c0_i32_0 = arith.constant 0 : i32
    %c0_i32_1 = arith.constant 0 : i32
    return %c0_i32, %c0_i32_0 : i32, i32
  }
  func.func @transform_4(%arg0: i32) -> (i32, i32) {
    %c0_i32 = arith.constant 0 : i32
    %c0_i32_0 = arith.constant 0 : i32
    %c0_i32_1 = arith.constant 0 : i32
    return %c0_i32, %c0_i32_0 : i32, i32
  }
  func.func @transform_5(%arg0: i32) -> (i32, i32) {
    %c0_i32 = arith.constant 0 : i32
    %c0_i32_0 = arith.constant 0 : i32
    %c0_i32_1 = arith.constant 0 : i32
    return %c0_i32, %c0_i32_0 : i32, i32
  }
  func.func @transform_6(%arg0: i32) -> (i32, i32) {
    %c0_i32 = arith.constant 0 : i32
    %c0_i32_0 = arith.constant 0 : i32
    %c0_i32_1 = arith.constant 0 : i32
    return %c0_i32, %c0_i32_0 : i32, i32
  }
  func.func @transform_7(%arg0: i32) -> (i32, i32) {
    %c0_i32 = arith.constant 0 : i32
    %c0_i32_0 = arith.constant 0 : i32
    return %arg0, %c0_i32 : i32, i32
  }
}

</mosaic_0001>

<llo_original>
// kernel: tpu_custom_call.1
$region0: #{tpu_custom_call.1}
  #allocation0 [shape = 'u32[]', space=smem, size = 0x4, offset = 0x4, fixed_abs, tag = 'smem constant byte address 0x4 - core index']
  #allocation1 [shape = 'u32[72,128]{1,0:T(1,128)}', space=vmem, size = 0x9000, scoped, tag = 'internal scratch']
  %s0 = inlined_call_operand.vmem [shape: f32[512,32], index: 0, kind: input, shape index: {}]
  %s1 = inlined_call_operand.vmem [shape: bf16[32,64], index: 1, kind: input, shape index: {}]
  %s2 = inlined_call_operand.vmem [shape: f32[1,64], index: 2, kind: input, shape index: {}]
  %s3 = inlined_call_operand.vmem [shape: bf16[64,128], index: 3, kind: input, shape index: {}]
  %s4 = inlined_call_operand.vmem [shape: f32[1,128], index: 4, kind: input, shape index: {}]
  %s5 = inlined_call_operand.vmem [shape: bf16[128,16], index: 5, kind: input, shape index: {}]
  %s6 = inlined_call_operand.vmem [shape: f32[1,16], index: 6, kind: input, shape index: {}]
  %s7 = inlined_call_operand.vmem [shape: f32[512,16], index: 7, kind: output, shape index: {}]
  %s8 = sld [smem:[#allocation0]]
  $region38: #{tpu_custom_call.1} parent=0
    _
  %s10 = ssub.s32 1, %s8
  %s11 = scalar_select 0, %s10, %s8
  // Predicated region
  $region2: #{tpu_custom_call.1} parent=0 // pred_check
    _
  $region3: #{tpu_custom_call.1} parent=0 // pred_check_branch
    %13 = sbr.rel (0) target = $region5
  $region4: #{tpu_custom_call.1} parent=0 // pred_region
    _
  $region5: #{tpu_custom_call.1} parent=0 // pred_fallthru
    _
  // Predicated region
  $region6: #{tpu_custom_call.1} parent=0 // pred_check
    _
  $region7: #{tpu_custom_call.1} parent=0 // pred_check_branch
    %15 = sbr.rel (0) target = $region9
  $region8: #{tpu_custom_call.1} parent=0 // pred_region
    _
  $region9: #{tpu_custom_call.1} parent=0 // pred_fallthru
    _
  // Predicated region
  $region10: #{tpu_custom_call.1} parent=0 // pred_check
    _
  $region11: #{tpu_custom_call.1} parent=0 // pred_check_branch
    %17 = sbr.rel (0) target = $region13
  $region12: #{tpu_custom_call.1} parent=0 // pred_region
    _
  $region13: #{tpu_custom_call.1} parent=0 // pred_fallthru
    _
  // Predicated region
  $region14: #{tpu_custom_call.1} parent=0 // pred_check
    _
  $region15: #{tpu_custom_call.1} parent=0 // pred_check_branch
    %19 = sbr.rel (0) target = $region17
  $region16: #{tpu_custom_call.1} parent=0 // pred_region
    _
  $region17: #{tpu_custom_call.1} parent=0 // pred_fallthru
    _
  // Predicated region
  $region18: #{tpu_custom_call.1} parent=0 // pred_check
    _
  $region19: #{tpu_custom_call.1} parent=0 // pred_check_branch
    %21 = sbr.rel (0) target = $region21
  $region20: #{tpu_custom_call.1} parent=0 // pred_region
    _
  $region21: #{tpu_custom_call.1} parent=0 // pred_fallthru
    _
  // Predicated region
  $region22: #{tpu_custom_call.1} parent=0 // pred_check
    _
  $region23: #{tpu_custom_call.1} parent=0 // pred_check_branch
    %23 = sbr.rel (0) target = $region25
  $region24: #{tpu_custom_call.1} parent=0 // pred_region
    _
  $region25: #{tpu_custom_call.1} parent=0 // pred_fallthru
    _
  // Predicated region
  $region26: #{tpu_custom_call.1} parent=0 // pred_check
    _
  $region27: #{tpu_custom_call.1} parent=0 // pred_check_branch
    %25 = sbr.rel (0) target = $region29
  $region28: #{tpu_custom_call.1} parent=0 // pred_region
    _
  $region29: #{tpu_custom_call.1} parent=0 // pred_fallthru
    _
  %v27 = vld [vmem:[%s0] sm:$0xff]
  %v28 = vld [vmem:[%s0 + $0x8] sm:$0xff]
  %v29 = vld [vmem:[%s0 + $0x10] sm:$0xff]
  %v30 = vld [vmem:[%s0 + $0x18] sm:$0xff]
  %v31 = vld [vmem:[%s0 + $0x20] sm:$0xff]
  %v32 = vld [vmem:[%s0 + $0x28] sm:$0xff]
  %v33 = vld [vmem:[%s0 + $0x30] sm:$0xff]
  %v34 = vld [vmem:[%s0 + $0x38] sm:$0xff]
  %v35 = vld [vmem:[%s0 + $0x40] sm:$0xff]
  %v36 = vld [vmem:[%s0 + $0x48] sm:$0xff]
  %v37 = vld [vmem:[%s0 + $0x50] sm:$0xff]
  %v38 = vld [vmem:[%s0 + $0x58] sm:$0xff]
  %v39 = vld [vmem:[%s0 + $0x60] sm:$0xff]
  %v40 = vld [vmem:[%s0 + $0x68] sm:$0xff]
  %v41 = vld [vmem:[%s0 + $0x70] sm:$0xff]
  %v42 = vld [vmem:[%s0 + $0x78] sm:$0xff]
  %v43 = vld [vmem:[%s0 + $0x80] sm:$0xff]
  %v44 = vld [vmem:[%s0 + $0x88] sm:$0xff]
  %v45 = vld [vmem:[%s0 + $0x90] sm:$0xff]
  %v46 = vld [vmem:[%s0 + $0x98] sm:$0xff]
  %v47 = vld [vmem:[%s0 + $0xa0] sm:$0xff]
  %v48 = vld [vmem:[%s0 + $0xa8] sm:$0xff]
  %v49 = vld [vmem:[%s0 + $0xb0] sm:$0xff]
  %v50 = vld [vmem:[%s0 + $0xb8] sm:$0xff]
  %v51 = vld [vmem:[%s0 + $0xc0] sm:$0xff]
  %v52 = vld [vmem:[%s0 + $0xc8] sm:$0xff]
  %v53 = vld [vmem:[%s0 + $0xd0] sm:$0xff]
  %v54 = vld [vmem:[%s0 + $0xd8] sm:$0xff]
  %v55 = vld [vmem:[%s0 + $0xe0] sm:$0xff]
  %v56 = vld [vmem:[%s0 + $0xe8] sm:$0xff]
  %v57 = vld [vmem:[%s0 + $0xf0] sm:$0xff]
  %v58 = vld [vmem:[%s0 + $0xf8] sm:$0xff]
  %v59 = vld [vmem:[%s0 + $0x100] sm:$0xff]
  %v60 = vld [vmem:[%s0 + $0x108] sm:$0xff]
  %v61 = vld [vmem:[%s0 + $0x110] sm:$0xff]
  %v62 = vld [vmem:[%s0 + $0x118] sm:$0xff]
  %v63 = vld [vmem:[%s0 + $0x120] sm:$0xff]
  %v64 = vld [vmem:[%s0 + $0x128] sm:$0xff]
  %v65 = vld [vmem:[%s0 + $0x130] sm:$0xff]
  %v66 = vld [vmem:[%s0 + $0x138] sm:$0xff]
  %v67 = vld [vmem:[%s0 + $0x140] sm:$0xff]
  %v68 = vld [vmem:[%s0 + $0x148] sm:$0xff]
  %v69 = vld [vmem:[%s0 + $0x150] sm:$0xff]
  %v70 = vld [vmem:[%s0 + $0x158] sm:$0xff]
  %v71 = vld [vmem:[%s0 + $0x160] sm:$0xff]
  %v72 = vld [vmem:[%s0 + $0x168] sm:$0xff]
  %v73 = vld [vmem:[%s0 + $0x170] sm:$0xff]
  %v74 = vld [vmem:[%s0 + $0x178] sm:$0xff]
  %v75 = vld [vmem:[%s0 + $0x180] sm:$0xff]
  %v76 = vld [vmem:[%s0 + $0x188] sm:$0xff]
  %v77 = vld [vmem:[%s0 + $0x190] sm:$0xff]
  %v78 = vld [vmem:[%s0 + $0x198] sm:$0xff]
  %v79 = vld [vmem:[%s0 + $0x1a0] sm:$0xff]
  %v80 = vld [vmem:[%s0 + $0x1a8] sm:$0xff]
  %v81 = vld [vmem:[%s0 + $0x1b0] sm:$0xff]
  %v82 = vld [vmem:[%s0 + $0x1b8] sm:$0xff]
  %v83 = vld [vmem:[%s0 + $0x1c0] sm:$0xff]
  %v84 = vld [vmem:[%s0 + $0x1c8] sm:$0xff]
  %v85 = vld [vmem:[%s0 + $0x1d0] sm:$0xff]
  %v86 = vld [vmem:[%s0 + $0x1d8] sm:$0xff]
  %v87 = vld [vmem:[%s0 + $0x1e0] sm:$0xff]
  %v88 = vld [vmem:[%s0 + $0x1e8] sm:$0xff]
  %v89 = vld [vmem:[%s0 + $0x1f0] sm:$0xff]
  %v90 = vld [vmem:[%s0 + $0x1f8] sm:$0xff]
  %v91 = vpack.c.bf16 %v28, %v27
  %v92 = vpack.c.bf16 %v30, %v29
  %v93 = vpack.c.bf16 %v32, %v31
  %v94 = vpack.c.bf16 %v34, %v33
  %v95 = vpack.c.bf16 %v36, %v35
  %v96 = vpack.c.bf16 %v38, %v37
  %v97 = vpack.c.bf16 %v40, %v39
  %v98 = vpack.c.bf16 %v42, %v41
  %v99 = vpack.c.bf16 %v44, %v43
  %v100 = vpack.c.bf16 %v46, %v45
  %v101 = vpack.c.bf16 %v48, %v47
  %v102 = vpack.c.bf16 %v50, %v49
  %v103 = vpack.c.bf16 %v52, %v51
  %v104 = vpack.c.bf16 %v54, %v53
  %v105 = vpack.c.bf16 %v56, %v55
  %v106 = vpack.c.bf16 %v58, %v57
  %v107 = vpack.c.bf16 %v60, %v59
  %v108 = vpack.c.bf16 %v62, %v61
  %v109 = vpack.c.bf16 %v64, %v63
  %v110 = vpack.c.bf16 %v66, %v65
  %v111 = vpack.c.bf16 %v68, %v67
  %v112 = vpack.c.bf16 %v70, %v69
  %v113 = vpack.c.bf16 %v72, %v71
  %v114 = vpack.c.bf16 %v74, %v73
  %v115 = vpack.c.bf16 %v76, %v75
  %v116 = vpack.c.bf16 %v78, %v77
  %v117 = vpack.c.bf16 %v80, %v79
  %v118 = vpack.c.bf16 %v82, %v81
  %v119 = vpack.c.bf16 %v84, %v83
  %v120 = vpack.c.bf16 %v86, %v85
  %v121 = vpack.c.bf16 %v88, %v87
  %v122 = vpack.c.bf16 %v90, %v89
  %v123 = vld [vmem:[%s1] sm:$0xf]
  %v124 = vld [vmem:[%s1 + $0x4] sm:$0xf]
  %v125 = vld [vmem:[%s1 + $0x8] sm:$0xf]
  %v126 = vld [vmem:[%s1 + $0xc] sm:$0xf]
  %v127 = vld [vmem:[%s2] sm:$0x1]
  %v129 = vperm.slane %v127, 0
  %v135 = vunpack.c.l.b16 %v123
  %v136 = vunpack.c.l.b16 %v124
  %v137 = vunpack.c.l.b16 %v125
  %v138 = vunpack.c.l.b16 %v126
  %v139 = vpack.c.b16 %v136, %v135
  %v140 = vpack.c.b16 %v138, %v137
  %vm143 = vcmask 261120
  %v145 = vsel %vm143, %v91, 0
  %v148 = vsel %vm143, %v92, 0
  %v151 = vsel %vm143, %v93, 0
  %v154 = vsel %vm143, %v94, 0
  %v157 = vsel %vm143, %v95, 0
  %v160 = vsel %vm143, %v96, 0
  %v163 = vsel %vm143, %v97, 0
  %v166 = vsel %vm143, %v98, 0
  %v169 = vsel %vm143, %v99, 0
  %v172 = vsel %vm143, %v100, 0
  %v175 = vsel %vm143, %v101, 0
  %v178 = vsel %vm143, %v102, 0
  %v181 = vsel %vm143, %v103, 0
  %v184 = vsel %vm143, %v104, 0
  %v187 = vsel %vm143, %v105, 0
  %v190 = vsel %vm143, %v106, 0
  %v193 = vsel %vm143, %v107, 0
  %v196 = vsel %vm143, %v108, 0
  %v199 = vsel %vm143, %v109, 0
  %v202 = vsel %vm143, %v110, 0
  %v205 = vsel %vm143, %v111, 0
  %v208 = vsel %vm143, %v112, 0
  %v211 = vsel %vm143, %v113, 0
  %v214 = vsel %vm143, %v114, 0
  %v217 = vsel %vm143, %v115, 0
  %v220 = vsel %vm143, %v116, 0
  %v223 = vsel %vm143, %v117, 0
  %v226 = vsel %vm143, %v118, 0
  %v229 = vsel %vm143, %v119, 0
  %v232 = vsel %vm143, %v120, 0
  %v235 = vsel %vm143, %v121, 0
  %v238 = vsel %vm143, %v122, 0
  %240 = vmatpush.bf16.msra.mxu0 0
  %241 = vmatpush.bf16.msra.mxu0 0
  %242 = vmatpush.bf16.msra.mxu0 0
  %243 = vmatpush.bf16.msra.mxu0 0
  %244 = vmatpush.bf16.msra.mxu0 0
  %245 = vmatpush.bf16.msra.mxu0 0
  %246 = vmatpush.bf16.msra.mxu0 %v140
  %247 = vmatpush.bf16.msra.mxu0 %v139
  %248 = vmatmul.bf16.gmra.mxu0 %v145
  %v249 = vpop.f32.mrf.mxu0
  %v250 = vadd.f32 %v129, %v249
  %v251 = vpop.f32.mrf.mxu0
  %v252 = vadd.f32 %v129, %v251
  %253 = vmatmul.bf16.gmra.mxu0 %v148
  %v254 = vpop.f32.mrf.mxu0
  %v255 = vadd.f32 %v129, %v254
  %v256 = vpop.f32.mrf.mxu0
  %v257 = vadd.f32 %v129, %v256
  %258 = vmatmul.bf16.gmra.mxu0 %v151
  %v259 = vpop.f32.mrf.mxu0
  %v260 = vadd.f32 %v129, %v259
  %v261 = vpop.f32.mrf.mxu0
  %v262 = vadd.f32 %v129, %v261
  %263 = vmatmul.bf16.gmra.mxu0 %v154
  %v264 = vpop.f32.mrf.mxu0
  %v265 = vadd.f32 %v129, %v264
  %v266 = vpop.f32.mrf.mxu0
  %v267 = vadd.f32 %v129, %v266
  %268 = vmatmul.bf16.gmra.mxu0 %v157
  %v269 = vpop.f32.mrf.mxu0
  %v270 = vadd.f32 %v129, %v269
  %v271 = vpop.f32.mrf.mxu0
  %v272 = vadd.f32 %v129, %v271
  %273 = vmatmul.bf16.gmra.mxu0 %v160
  %v274 = vpop.f32.mrf.mxu0
  %v275 = vadd.f32 %v129, %v274
  %v276 = vpop.f32.mrf.mxu0
  %v277 = vadd.f32 %v129, %v276
  %278 = vmatmul.bf16.gmra.mxu0 %v163
  %v279 = vpop.f32.mrf.mxu0
  %v280 = vadd.f32 %v129, %v279
  %v281 = vpop.f32.mrf.mxu0
  %v282 = vadd.f32 %v129, %v281
  %283 = vmatmul.bf16.gmra.mxu0 %v166
  %v284 = vpop.f32.mrf.mxu0
  %v285 = vadd.f32 %v129, %v284
  %v286 = vpop.f32.mrf.mxu0
  %v287 = vadd.f32 %v129, %v286
  %288 = vmatmul.bf16.gmra.mxu0 %v169
  %v289 = vpop.f32.mrf.mxu0
  %v290 = vadd.f32 %v129, %v289
  %v291 = vpop.f32.mrf.mxu0
  %v292 = vadd.f32 %v129, %v291
  %293 = vmatmul.bf16.gmra.mxu0 %v172
  %v294 = vpop.f32.mrf.mxu0
  %v295 = vadd.f32 %v129, %v294
  %v296 = vpop.f32.mrf.mxu0
  %v297 = vadd.f32 %v129, %v296
  %298 = vmatmul.bf16.gmra.mxu0 %v175
  %v299 = vpop.f32.mrf.mxu0
  %v300 = vadd.f32 %v129, %v299
  %v301 = vpop.f32.mrf.mxu0
  %v302 = vadd.f32 %v129, %v301
  %303 = vmatmul.bf16.gmra.mxu0 %v178
  %v304 = vpop.f32.mrf.mxu0
  %v305 = vadd.f32 %v129, %v304
  %v306 = vpop.f32.mrf.mxu0
  %v307 = vadd.f32 %v129, %v306
  %308 = vmatmul.bf16.gmra.mxu0 %v181
  %v309 = vpop.f32.mrf.mxu0
  %v310 = vadd.f32 %v129, %v309
  %v311 = vpop.f32.mrf.mxu0
  %v312 = vadd.f32 %v129, %v311
  %313 = vmatmul.bf16.gmra.mxu0 %v184
  %v314 = vpop.f32.mrf.mxu0
  %v315 = vadd.f32 %v129, %v314
  %v316 = vpop.f32.mrf.mxu0
  %v317 = vadd.f32 %v129, %v316
  %318 = vmatmul.bf16.gmra.mxu0 %v187
  %v319 = vpop.f32.mrf.mxu0
  %v320 = vadd.f32 %v129, %v319
  %v321 = vpop.f32.mrf.mxu0
  %v322 = vadd.f32 %v129, %v321
  %323 = vmatmul.bf16.gmra.mxu0 %v190
  %v324 = vpop.f32.mrf.mxu0
  %v325 = vadd.f32 %v129, %v324
  %v326 = vpop.f32.mrf.mxu0
  %v327 = vadd.f32 %v129, %v326
  %328 = vmatmul.bf16.gmra.mxu0 %v193
  %v329 = vpop.f32.mrf.mxu0
  %v330 = vadd.f32 %v129, %v329
  %v331 = vpop.f32.mrf.mxu0
  %v332 = vadd.f32 %v129, %v331
  %333 = vmatmul.bf16.gmra.mxu0 %v196
  %v334 = vpop.f32.mrf.mxu0
  %v335 = vadd.f32 %v129, %v334
  %v336 = vpop.f32.mrf.mxu0
  %v337 = vadd.f32 %v129, %v336
  %338 = vmatmul.bf16.gmra.mxu0 %v199
  %v339 = vpop.f32.mrf.mxu0
  %v340 = vadd.f32 %v129, %v339
  %v341 = vpop.f32.mrf.mxu0
  %v342 = vadd.f32 %v129, %v341
  %343 = vmatmul.bf16.gmra.mxu0 %v202
  %v344 = vpop.f32.mrf.mxu0
  %v345 = vadd.f32 %v129, %v344
  %v346 = vpop.f32.mrf.mxu0
  %v347 = vadd.f32 %v129, %v346
  %348 = vmatmul.bf16.gmra.mxu0 %v205
  %v349 = vpop.f32.mrf.mxu0
  %v350 = vadd.f32 %v129, %v349
  %v351 = vpop.f32.mrf.mxu0
  %v352 = vadd.f32 %v129, %v351
  %353 = vmatmul.bf16.gmra.mxu0 %v208
  %v354 = vpop.f32.mrf.mxu0
  %v355 = vadd.f32 %v129, %v354
  %v356 = vpop.f32.mrf.mxu0
  %v357 = vadd.f32 %v129, %v356
  %358 = vmatmul.bf16.gmra.mxu0 %v211
  %v359 = vpop.f32.mrf.mxu0
  %v360 = vadd.f32 %v129, %v359
  %v361 = vpop.f32.mrf.mxu0
  %v362 = vadd.f32 %v129, %v361
  %363 = vmatmul.bf16.gmra.mxu0 %v214
  %v364 = vpop.f32.mrf.mxu0
  %v365 = vadd.f32 %v129, %v364
  %v366 = vpop.f32.mrf.mxu0
  %v367 = vadd.f32 %v129, %v366
  %368 = vmatmul.bf16.gmra.mxu0 %v217
  %v369 = vpop.f32.mrf.mxu0
  %v370 = vadd.f32 %v129, %v369
  %v371 = vpop.f32.mrf.mxu0
  %v372 = vadd.f32 %v129, %v371
  %373 = vmatmul.bf16.gmra.mxu0 %v220
  %v374 = vpop.f32.mrf.mxu0
  %v375 = vadd.f32 %v129, %v374
  %v376 = vpop.f32.mrf.mxu0
  %v377 = vadd.f32 %v129, %v376
  %378 = vmatmul.bf16.gmra.mxu0 %v223
  %v379 = vpop.f32.mrf.mxu0
  %v380 = vadd.f32 %v129, %v379
  %v381 = vpop.f32.mrf.mxu0
  %v382 = vadd.f32 %v129, %v381
  %383 = vmatmul.bf16.gmra.mxu0 %v226
  %v384 = vpop.f32.mrf.mxu0
  %v385 = vadd.f32 %v129, %v384
  %v386 = vpop.f32.mrf.mxu0
  %v387 = vadd.f32 %v129, %v386
  %388 = vmatmul.bf16.gmra.mxu0 %v229
  %v389 = vpop.f32.mrf.mxu0
  %v390 = vadd.f32 %v129, %v389
  %v391 = vpop.f32.mrf.mxu0
  %v392 = vadd.f32 %v129, %v391
  %393 = vmatmul.bf16.gmra.mxu0 %v232
  %v394 = vpop.f32.mrf.mxu0
  %v395 = vadd.f32 %v129, %v394
  %v396 = vpop.f32.mrf.mxu0
  %v397 = vadd.f32 %v129, %v396
  %398 = vmatmul.bf16.gmra.mxu0 %v235
  %v399 = vpop.f32.mrf.mxu0
  %v400 = vadd.f32 %v129, %v399
  %v401 = vpop.f32.mrf.mxu0
  %v402 = vadd.f32 %v129, %v401
  %403 = vmatmul.bf16.gmra.mxu0 %v238
  %v404 = vpop.f32.mrf.mxu0
  %v405 = vadd.f32 %v129, %v404
  %v406 = vpop.f32.mrf.mxu0
  %v407 = vadd.f32 %v129, %v406
  %408 = vdwg.mxu0
  %v409 = vmax.f32 %v250, 0.0
  %v410 = vmax.f32 %v252, 0.0
  %v411 = vmax.f32 %v255, 0.0
  %v412 = vmax.f32 %v257, 0.0
  %v413 = vmax.f32 %v260, 0.0
  %v414 = vmax.f32 %v262, 0.0
  %v415 = vmax.f32 %v265, 0.0
  %v416 = vmax.f32 %v267, 0.0
  %v417 = vmax.f32 %v270, 0.0
  %v418 = vmax.f32 %v272, 0.0
  %v419 = vmax.f32 %v275, 0.0
  %v420 = vmax.f32 %v277, 0.0
  %v421 = vmax.f32 %v280, 0.0
  %v422 = vmax.f32 %v282, 0.0
  %v423 = vmax.f32 %v285, 0.0
  %v424 = vmax.f32 %v287, 0.0
  %v425 = vmax.f32 %v290, 0.0
  %v426 = vmax.f32 %v292, 0.0
  %v427 = vmax.f32 %v295, 0.0
  %v428 = vmax.f32 %v297, 0.0
  %v429 = vmax.f32 %v300, 0.0
  %v430 = vmax.f32 %v302, 0.0
  %v431 = vmax.f32 %v305, 0.0
  %v432 = vmax.f32 %v307, 0.0
  %v433 = vmax.f32 %v310, 0.0
  %v434 = vmax.f32 %v312, 0.0
  %v435 = vmax.f32 %v315, 0.0
  %v436 = vmax.f32 %v317, 0.0
  %v437 = vmax.f32 %v320, 0.0
  %v438 = vmax.f32 %v322, 0.0
  %v439 = vmax.f32 %v325, 0.0
  %v440 = vmax.f32 %v327, 0.0
  %v441 = vmax.f32 %v330, 0.0
  %v442 = vmax.f32 %v332, 0.0
  %v443 = vmax.f32 %v335, 0.0
  %v444 = vmax.f32 %v337, 0.0
  %v445 = vmax.f32 %v340, 0.0
  %v446 = vmax.f32 %v342, 0.0
  %v447 = vmax.f32 %v345, 0.0
  %v448 = vmax.f32 %v347, 0.0
  %v449 = vmax.f32 %v350, 0.0
  %v450 = vmax.f32 %v352, 0.0
  %v451 = vmax.f32 %v355, 0.0
  %v452 = vmax.f32 %v357, 0.0
  %v453 = vmax.f32 %v360, 0.0
  %v454 = vmax.f32 %v362, 0.0
  %v455 = vmax.f32 %v365, 0.0
  %v456 = vmax.f32 %v367, 0.0
  %v457 = vmax.f32 %v370, 0.0
  %v458 = vmax.f32 %v372, 0.0
  %v459 = vmax.f32 %v375, 0.0
  %v460 = vmax.f32 %v377, 0.0
  %v461 = vmax.f32 %v380, 0.0
  %v462 = vmax.f32 %v382, 0.0
  %v463 = vmax.f32 %v385, 0.0
  %v464 = vmax.f32 %v387, 0.0
  %v465 = vmax.f32 %v390, 0.0
  %v466 = vmax.f32 %v392, 0.0
  %v467 = vmax.f32 %v395, 0.0
  %v468 = vmax.f32 %v397, 0.0
  %v469 = vmax.f32 %v400, 0.0
  %v470 = vmax.f32 %v402, 0.0
  %v471 = vmax.f32 %v405, 0.0
  %v472 = vmax.f32 %v407, 0.0
  %v473 = vpack.c.bf16 %v410, %v409
  %v474 = vpack.c.bf16 %v412, %v411
  %v475 = vpack.c.bf16 %v414, %v413
  %v476 = vpack.c.bf16 %v416, %v415
  %v477 = vpack.c.bf16 %v418, %v417
  %v478 = vpack.c.bf16 %v420, %v419
  %v479 = vpack.c.bf16 %v422, %v421
  %v480 = vpack.c.bf16 %v424, %v423
  %v481 = vpack.c.bf16 %v426, %v425
  %v482 = vpack.c.bf16 %v428, %v427
  %v483 = vpack.c.bf16 %v430, %v429
  %v484 = vpack.c.bf16 %v432, %v431
  %v485 = vpack.c.bf16 %v434, %v433
  %v486 = vpack.c.bf16 %v436, %v435
  %v487 = vpack.c.bf16 %v438, %v437
  %v488 = vpack.c.bf16 %v440, %v439
  %v489 = vpack.c.bf16 %v442, %v441
  %v490 = vpack.c.bf16 %v444, %v443
  %v491 = vpack.c.bf16 %v446, %v445
  %v492 = vpack.c.bf16 %v448, %v447
  %v493 = vpack.c.bf16 %v450, %v449
  %v494 = vpack.c.bf16 %v452, %v451
  %v495 = vpack.c.bf16 %v454, %v453
  %v496 = vpack.c.bf16 %v456, %v455
  %v497 = vpack.c.bf16 %v458, %v457
  %v498 = vpack.c.bf16 %v460, %v459
  %v499 = vpack.c.bf16 %v462, %v461
  %v500 = vpack.c.bf16 %v464, %v463
  %v501 = vpack.c.bf16 %v466, %v465
  %v502 = vpack.c.bf16 %v468, %v467
  %v503 = vpack.c.bf16 %v470, %v469
  %v504 = vpack.c.bf16 %v472, %v471
  %v505 = vld [vmem:[%s3] sm:$0xf]
  %v506 = vld [vmem:[%s3 + $0x4] sm:$0xf]
  %v507 = vld [vmem:[%s3 + $0x8] sm:$0xf]
  %v508 = vld [vmem:[%s3 + $0xc] sm:$0xf]
  %v509 = vld [vmem:[%s3 + $0x10] sm:$0xf]
  %v510 = vld [vmem:[%s3 + $0x14] sm:$0xf]
  %v511 = vld [vmem:[%s3 + $0x18] sm:$0xf]
  %v512 = vld [vmem:[%s3 + $0x1c] sm:$0xf]
  %v513 = vld [vmem:[%s4] sm:$0x1]
  %v515 = vperm.slane %v513, 0
  %v525 = vunpack.c.l.b16 %v505
  %v526 = vunpack.c.l.b16 %v506
  %v527 = vunpack.c.l.b16 %v507
  %v528 = vunpack.c.l.b16 %v508
  %v529 = vunpack.c.l.b16 %v509
  %v530 = vunpack.c.l.b16 %v510
  %v531 = vunpack.c.l.b16 %v511
  %v532 = vunpack.c.l.b16 %v512
  %v533 = vpack.c.b16 %v526, %v525
  %v534 = vpack.c.b16 %v528, %v527
  %v535 = vpack.c.b16 %v530, %v529
  %v536 = vpack.c.b16 %v532, %v531
  %vm541 = vcmask 523264
  %v543 = vsel %vm541, %v473, 0
  %v546 = vsel %vm541, %v474, 0
  %v549 = vsel %vm541, %v475, 0
  %v552 = vsel %vm541, %v476, 0
  %v555 = vsel %vm541, %v477, 0
  %v558 = vsel %vm541, %v478, 0
  %v561 = vsel %vm541, %v479, 0
  %v564 = vsel %vm541, %v480, 0
  %v567 = vsel %vm541, %v481, 0
  %v570 = vsel %vm541, %v482, 0
  %v573 = vsel %vm541, %v483, 0
  %v576 = vsel %vm541, %v484, 0
  %v579 = vsel %vm541, %v485, 0
  %v582 = vsel %vm541, %v486, 0
  %v585 = vsel %vm541, %v487, 0
  %v588 = vsel %vm541, %v488, 0
  %v591 = vsel %vm541, %v489, 0
  %v594 = vsel %vm541, %v490, 0
  %v597 = vsel %vm541, %v491, 0
  %v600 = vsel %vm541, %v492, 0
  %v603 = vsel %vm541, %v493, 0
  %v606 = vsel %vm541, %v494, 0
  %v609 = vsel %vm541, %v495, 0
  %v612 = vsel %vm541, %v496, 0
  %v615 = vsel %vm541, %v497, 0
  %v618 = vsel %vm541, %v498, 0
  %v621 = vsel %vm541, %v499, 0
  %v624 = vsel %vm541, %v500, 0
  %v627 = vsel %vm541, %v501, 0
  %v630 = vsel %vm541, %v502, 0
  %v633 = vsel %vm541, %v503, 0
  %v636 = vsel %vm541, %v504, 0
  %638 = vmatpush.bf16.msra.mxu0 0
  %639 = vmatpush.bf16.msra.mxu0 0
  %640 = vmatpush.bf16.msra.mxu0 0
  %641 = vmatpush.bf16.msra.mxu0 0
  %642 = vmatpush.bf16.msra.mxu0 %v536
  %643 = vmatpush.bf16.msra.mxu0 %v535
  %644 = vmatpush.bf16.msra.mxu0 %v534
  %645 = vmatpush.bf16.msra.mxu0 %v533
  %646 = vmatmul.bf16.gmra.mxu0 %v543
  %v647 = vpop.f32.mrf.mxu0
  %v648 = vadd.f32 %v515, %v647
  %v649 = vpop.f32.mrf.mxu0
  %v650 = vadd.f32 %v515, %v649
  %651 = vmatmul.bf16.gmra.mxu0 %v546
  %v652 = vpop.f32.mrf.mxu0
  %v653 = vadd.f32 %v515, %v652
  %v654 = vpop.f32.mrf.mxu0
  %v655 = vadd.f32 %v515, %v654
  %656 = vmatmul.bf16.gmra.mxu0 %v549
  %v657 = vpop.f32.mrf.mxu0
  %v658 = vadd.f32 %v515, %v657
  %v659 = vpop.f32.mrf.mxu0
  %v660 = vadd.f32 %v515, %v659
  %661 = vmatmul.bf16.gmra.mxu0 %v552
  %v662 = vpop.f32.mrf.mxu0
  %v663 = vadd.f32 %v515, %v662
  %v664 = vpop.f32.mrf.mxu0
  %v665 = vadd.f32 %v515, %v664
  %666 = vmatmul.bf16.gmra.mxu0 %v555
  %v667 = vpop.f32.mrf.mxu0
  %v668 = vadd.f32 %v515, %v667
  %v669 = vpop.f32.mrf.mxu0
  %v670 = vadd.f32 %v515, %v669
  %671 = vmatmul.bf16.gmra.mxu0 %v558
  %v672 = vpop.f32.mrf.mxu0
  %v673 = vadd.f32 %v515, %v672
  %v674 = vpop.f32.mrf.mxu0
  %v675 = vadd.f32 %v515, %v674
  %676 = vmatmul.bf16.gmra.mxu0 %v561
  %v677 = vpop.f32.mrf.mxu0
  %v678 = vadd.f32 %v515, %v677
  %v679 = vpop.f32.mrf.mxu0
  %v680 = vadd.f32 %v515, %v679
  %681 = vmatmul.bf16.gmra.mxu0 %v564
  %v682 = vpop.f32.mrf.mxu0
  %v683 = vadd.f32 %v515, %v682
  %v684 = vpop.f32.mrf.mxu0
  %v685 = vadd.f32 %v515, %v684
  %686 = vmatmul.bf16.gmra.mxu0 %v567
  %v687 = vpop.f32.mrf.mxu0
  %v688 = vadd.f32 %v515, %v687
  %v689 = vpop.f32.mrf.mxu0
  %v690 = vadd.f32 %v515, %v689
  %691 = vmatmul.bf16.gmra.mxu0 %v570
  %v692 = vpop.f32.mrf.mxu0
  %v693 = vadd.f32 %v515, %v692
  %v694 = vpop.f32.mrf.mxu0
  %v695 = vadd.f32 %v515, %v694
  %696 = vmatmul.bf16.gmra.mxu0 %v573
  %v697 = vpop.f32.mrf.mxu0
  %v698 = vadd.f32 %v515, %v697
  %v699 = vpop.f32.mrf.mxu0
  %v700 = vadd.f32 %v515, %v699
  %701 = vmatmul.bf16.gmra.mxu0 %v576
  %v702 = vpop.f32.mrf.mxu0
  %v703 = vadd.f32 %v515, %v702
  %v704 = vpop.f32.mrf.mxu0
  %v705 = vadd.f32 %v515, %v704
  %706 = vmatmul.bf16.gmra.mxu0 %v579
  %v707 = vpop.f32.mrf.mxu0
  %v708 = vadd.f32 %v515, %v707
  %v709 = vpop.f32.mrf.mxu0
  %v710 = vadd.f32 %v515, %v709
  %711 = vmatmul.bf16.gmra.mxu0 %v582
  %v712 = vpop.f32.mrf.mxu0
  %v713 = vadd.f32 %v515, %v712
  %v714 = vpop.f32.mrf.mxu0
  %v715 = vadd.f32 %v515, %v714
  %716 = vmatmul.bf16.gmra.mxu0 %v585
  %v717 = vpop.f32.mrf.mxu0
  %v718 = vadd.f32 %v515, %v717
  %v719 = vpop.f32.mrf.mxu0
  %v720 = vadd.f32 %v515, %v719
  %721 = vmatmul.bf16.gmra.mxu0 %v588
  %v722 = vpop.f32.mrf.mxu0
  %v723 = vadd.f32 %v515, %v722
  %v724 = vpop.f32.mrf.mxu0
  %v725 = vadd.f32 %v515, %v724
  %726 = vmatmul.bf16.gmra.mxu0 %v591
  %v727 = vpop.f32.mrf.mxu0
  %v728 = vadd.f32 %v515, %v727
  %v729 = vpop.f32.mrf.mxu0
  %v730 = vadd.f32 %v515, %v729
  %731 = vmatmul.bf16.gmra.mxu0 %v594
  %v732 = vpop.f32.mrf.mxu0
  %v733 = vadd.f32 %v515, %v732
  %v734 = vpop.f32.mrf.mxu0
  %v735 = vadd.f32 %v515, %v734
  %736 = vmatmul.bf16.gmra.mxu0 %v597
  %v737 = vpop.f32.mrf.mxu0
  %v738 = vadd.f32 %v515, %v737
  %v739 = vpop.f32.mrf.mxu0
  %v740 = vadd.f32 %v515, %v739
  %741 = vmatmul.bf16.gmra.mxu0 %v600
  %v742 = vpop.f32.mrf.mxu0
  %v743 = vadd.f32 %v515, %v742
  %v744 = vpop.f32.mrf.mxu0
  %v745 = vadd.f32 %v515, %v744
  %746 = vmatmul.bf16.gmra.mxu0 %v603
  %v747 = vpop.f32.mrf.mxu0
  %v748 = vadd.f32 %v515, %v747
  %v749 = vpop.f32.mrf.mxu0
  %v750 = vadd.f32 %v515, %v749
  %751 = vmatmul.bf16.gmra.mxu0 %v606
  %v752 = vpop.f32.mrf.mxu0
  %v753 = vadd.f32 %v515, %v752
  %v754 = vpop.f32.mrf.mxu0
  %v755 = vadd.f32 %v515, %v754
  %756 = vmatmul.bf16.gmra.mxu0 %v609
  %v757 = vpop.f32.mrf.mxu0
  %v758 = vadd.f32 %v515, %v757
  %v759 = vpop.f32.mrf.mxu0
  %v760 = vadd.f32 %v515, %v759
  %761 = vmatmul.bf16.gmra.mxu0 %v612
  %v762 = vpop.f32.mrf.mxu0
  %v763 = vadd.f32 %v515, %v762
  %v764 = vpop.f32.mrf.mxu0
  %v765 = vadd.f32 %v515, %v764
  %766 = vmatmul.bf16.gmra.mxu0 %v615
  %v767 = vpop.f32.mrf.mxu0
  %v768 = vadd.f32 %v515, %v767
  %v769 = vpop.f32.mrf.mxu0
  %v770 = vadd.f32 %v515, %v769
  %771 = vmatmul.bf16.gmra.mxu0 %v618
  %v772 = vpop.f32.mrf.mxu0
  %v773 = vadd.f32 %v515, %v772
  %v774 = vpop.f32.mrf.mxu0
  %v775 = vadd.f32 %v515, %v774
  %776 = vmatmul.bf16.gmra.mxu0 %v621
  %v777 = vpop.f32.mrf.mxu0
  %v778 = vadd.f32 %v515, %v777
  %v779 = vpop.f32.mrf.mxu0
  %v780 = vadd.f32 %v515, %v779
  %781 = vmatmul.bf16.gmra.mxu0 %v624
  %v782 = vpop.f32.mrf.mxu0
  %v783 = vadd.f32 %v515, %v782
  %v784 = vpop.f32.mrf.mxu0
  %v785 = vadd.f32 %v515, %v784
  %786 = vmatmul.bf16.gmra.mxu0 %v627
  %v787 = vpop.f32.mrf.mxu0
  %v788 = vadd.f32 %v515, %v787
  %v789 = vpop.f32.mrf.mxu0
  %v790 = vadd.f32 %v515, %v789
  %791 = vmatmul.bf16.gmra.mxu0 %v630
  %v792 = vpop.f32.mrf.mxu0
  %v793 = vadd.f32 %v515, %v792
  %v794 = vpop.f32.mrf.mxu0
  %v795 = vadd.f32 %v515, %v794
  %796 = vmatmul.bf16.gmra.mxu0 %v633
  %v797 = vpop.f32.mrf.mxu0
  %v798 = vadd.f32 %v515, %v797
  %v799 = vpop.f32.mrf.mxu0
  %v800 = vadd.f32 %v515, %v799
  %801 = vmatmul.bf16.gmra.mxu0 %v636
  %v802 = vpop.f32.mrf.mxu0
  %v803 = vadd.f32 %v515, %v802
  %v804 = vpop.f32.mrf.mxu0
  %v805 = vadd.f32 %v515, %v804
  %806 = vdwg.mxu0
  %v807 = vmax.f32 %v648, 0.0
  %v808 = vmax.f32 %v650, 0.0
  %v809 = vmax.f32 %v653, 0.0
  %v810 = vmax.f32 %v655, 0.0
  %v811 = vmax.f32 %v658, 0.0
  %v812 = vmax.f32 %v660, 0.0
  %v813 = vmax.f32 %v663, 0.0
  %v814 = vmax.f32 %v665, 0.0
  %v815 = vmax.f32 %v668, 0.0
  %v816 = vmax.f32 %v670, 0.0
  %v817 = vmax.f32 %v673, 0.0
  %v818 = vmax.f32 %v675, 0.0
  %v819 = vmax.f32 %v678, 0.0
  %v820 = vmax.f32 %v680, 0.0
  %v821 = vmax.f32 %v683, 0.0
  %v822 = vmax.f32 %v685, 0.0
  %v823 = vmax.f32 %v688, 0.0
  %v824 = vmax.f32 %v690, 0.0
  %v825 = vmax.f32 %v693, 0.0
  %v826 = vmax.f32 %v695, 0.0
  %v827 = vmax.f32 %v698, 0.0
  %v828 = vmax.f32 %v700, 0.0
  %v829 = vmax.f32 %v703, 0.0
  %v830 = vmax.f32 %v705, 0.0
  %v831 = vmax.f32 %v708, 0.0
  %v832 = vmax.f32 %v710, 0.0
  %v833 = vmax.f32 %v713, 0.0
  %v834 = vmax.f32 %v715, 0.0
  %v835 = vmax.f32 %v718, 0.0
  %v836 = vmax.f32 %v720, 0.0
  %v837 = vmax.f32 %v723, 0.0
  %v838 = vmax.f32 %v725, 0.0
  %v839 = vmax.f32 %v728, 0.0
  %v840 = vmax.f32 %v730, 0.0
  %v841 = vmax.f32 %v733, 0.0
  %v842 = vmax.f32 %v735, 0.0
  %v843 = vmax.f32 %v738, 0.0
  %v844 = vmax.f32 %v740, 0.0
  %v845 = vmax.f32 %v743, 0.0
  %v846 = vmax.f32 %v745, 0.0
  %v847 = vmax.f32 %v748, 0.0
  %v848 = vmax.f32 %v750, 0.0
  %v849 = vmax.f32 %v753, 0.0
  %v850 = vmax.f32 %v755, 0.0
  %v851 = vmax.f32 %v758, 0.0
  %v852 = vmax.f32 %v760, 0.0
  %v853 = vmax.f32 %v763, 0.0
  %v854 = vmax.f32 %v765, 0.0
  %v855 = vmax.f32 %v768, 0.0
  %v856 = vmax.f32 %v770, 0.0
  %v857 = vmax.f32 %v773, 0.0
  %v858 = vmax.f32 %v775, 0.0
  %v859 = vmax.f32 %v778, 0.0
  %v860 = vmax.f32 %v780, 0.0
  %v861 = vmax.f32 %v783, 0.0
  %v862 = vmax.f32 %v785, 0.0
  %v863 = vmax.f32 %v788, 0.0
  %v864 = vmax.f32 %v790, 0.0
  %v865 = vmax.f32 %v793, 0.0
  %v866 = vmax.f32 %v795, 0.0
  %v867 = vmax.f32 %v798, 0.0
  %v868 = vmax.f32 %v800, 0.0
  %v869 = vmax.f32 %v803, 0.0
  %v870 = vmax.f32 %v805, 0.0
  %v871 = vpack.c.bf16 %v808, %v807
  %v872 = vpack.c.bf16 %v810, %v809
  %v873 = vpack.c.bf16 %v812, %v811
  %v874 = vpack.c.bf16 %v814, %v813
  %v875 = vpack.c.bf16 %v816, %v815
  %v876 = vpack.c.bf16 %v818, %v817
  %v877 = vpack.c.bf16 %v820, %v819
  %v878 = vpack.c.bf16 %v822, %v821
  %v879 = vpack.c.bf16 %v824, %v823
  %v880 = vpack.c.bf16 %v826, %v825
  %v881 = vpack.c.bf16 %v828, %v827
  %v882 = vpack.c.bf16 %v830, %v829
  %v883 = vpack.c.bf16 %v832, %v831
  %v884 = vpack.c.bf16 %v834, %v833
  %v885 = vpack.c.bf16 %v836, %v835
  %v886 = vpack.c.bf16 %v838, %v837
  %v887 = vpack.c.bf16 %v840, %v839
  %v888 = vpack.c.bf16 %v842, %v841
  %v889 = vpack.c.bf16 %v844, %v843
  %v890 = vpack.c.bf16 %v846, %v845
  %v891 = vpack.c.bf16 %v848, %v847
  %v892 = vpack.c.bf16 %v850, %v849
  %v893 = vpack.c.bf16 %v852, %v851
  %v894 = vpack.c.bf16 %v854, %v853
  %v895 = vpack.c.bf16 %v856, %v855
  %v896 = vpack.c.bf16 %v858, %v857
  %v897 = vpack.c.bf16 %v860, %v859
  %v898 = vpack.c.bf16 %v862, %v861
  %v899 = vpack.c.bf16 %v864, %v863
  %v900 = vpack.c.bf16 %v866, %v865
  %v901 = vpack.c.bf16 %v868, %v867
  %v902 = vpack.c.bf16 %v870, %v869
  %v903 = vld [vmem:[%s5] sm:$0xf]
  %v904 = vld [vmem:[%s5 + $0x4] sm:$0xf]
  %v905 = vld [vmem:[%s5 + $0x8] sm:$0xf]
  %v906 = vld [vmem:[%s5 + $0xc] sm:$0xf]
  %v907 = vld [vmem:[%s5 + $0x10] sm:$0xf]
  %v908 = vld [vmem:[%s5 + $0x14] sm:$0xf]
  %v909 = vld [vmem:[%s5 + $0x18] sm:$0xf]
  %v910 = vld [vmem:[%s5 + $0x1c] sm:$0xf]
  %v911 = vld [vmem:[%s5 + $0x20] sm:$0xf]
  %v912 = vld [vmem:[%s5 + $0x24] sm:$0xf]
  %v913 = vld [vmem:[%s5 + $0x28] sm:$0xf]
  %v914 = vld [vmem:[%s5 + $0x2c] sm:$0xf]
  %v915 = vld [vmem:[%s5 + $0x30] sm:$0xf]
  %v916 = vld [vmem:[%s5 + $0x34] sm:$0xf]
  %v917 = vld [vmem:[%s5 + $0x38] sm:$0xf]
  %v918 = vld [vmem:[%s5 + $0x3c] sm:$0xf]
  %v919 = vld [vmem:[%s6] sm:$0x1]
  %v921 = vperm.slane %v919, 0
  %v939 = vunpack.c.l.b16 %v903
  %v940 = vunpack.c.l.b16 %v904
  %v941 = vunpack.c.l.b16 %v905
  %v942 = vunpack.c.l.b16 %v906
  %v943 = vunpack.c.l.b16 %v907
  %v944 = vunpack.c.l.b16 %v908
  %v945 = vunpack.c.l.b16 %v909
  %v946 = vunpack.c.l.b16 %v910
  %v947 = vunpack.c.l.b16 %v911
  %v948 = vunpack.c.l.b16 %v912
  %v949 = vunpack.c.l.b16 %v913
  %v950 = vunpack.c.l.b16 %v914
  %v951 = vunpack.c.l.b16 %v915
  %v952 = vunpack.c.l.b16 %v916
  %v953 = vunpack.c.l.b16 %v917
  %v954 = vunpack.c.l.b16 %v918
  %v955 = vpack.c.b16 %v940, %v939
  %v956 = vpack.c.b16 %v942, %v941
  %v957 = vpack.c.b16 %v944, %v943
  %v958 = vpack.c.b16 %v946, %v945
  %v959 = vpack.c.b16 %v948, %v947
  %v960 = vpack.c.b16 %v950, %v949
  %v961 = vpack.c.b16 %v952, %v951
  %v962 = vpack.c.b16 %v954, %v953
  %971 = vmatpush.bf16.msra.mxu0 %v962
  %972 = vmatpush.bf16.msra.mxu0 %v961
  %973 = vmatpush.bf16.msra.mxu0 %v960
  %974 = vmatpush.bf16.msra.mxu0 %v959
  %975 = vmatpush.bf16.msra.mxu0 %v958
  %976 = vmatpush.bf16.msra.mxu0 %v957
  %977 = vmatpush.bf16.msra.mxu0 %v956
  %978 = vmatpush.bf16.msra.mxu0 %v955
  %979 = vmatmul.bf16.gmra.mxu0 %v871
  %v980 = vpop.f32.mrf.mxu0
  %v981 = vadd.f32 %v921, %v980
  %v982 = vpop.f32.mrf.mxu0
  %v983 = vadd.f32 %v921, %v982
  %984 = vmatmul.bf16.gmra.mxu0 %v872
  %v985 = vpop.f32.mrf.mxu0
  %v986 = vadd.f32 %v921, %v985
  %v987 = vpop.f32.mrf.mxu0
  %v988 = vadd.f32 %v921, %v987
  %989 = vmatmul.bf16.gmra.mxu0 %v873
  %v990 = vpop.f32.mrf.mxu0
  %v991 = vadd.f32 %v921, %v990
  %v992 = vpop.f32.mrf.mxu0
  %v993 = vadd.f32 %v921, %v992
  %994 = vmatmul.bf16.gmra.mxu0 %v874
  %v995 = vpop.f32.mrf.mxu0
  %v996 = vadd.f32 %v921, %v995
  %v997 = vpop.f32.mrf.mxu0
  %v998 = vadd.f32 %v921, %v997
  %999 = vmatmul.bf16.gmra.mxu0 %v875
  %v1000 = vpop.f32.mrf.mxu0
  %v1001 = vadd.f32 %v921, %v1000
  %v1002 = vpop.f32.mrf.mxu0
  %v1003 = vadd.f32 %v921, %v1002
  %1004 = vmatmul.bf16.gmra.mxu0 %v876
  %v1005 = vpop.f32.mrf.mxu0
  %v1006 = vadd.f32 %v921, %v1005
  %v1007 = vpop.f32.mrf.mxu0
  %v1008 = vadd.f32 %v921, %v1007
  %1009 = vmatmul.bf16.gmra.mxu0 %v877
  %v1010 = vpop.f32.mrf.mxu0
  %v1011 = vadd.f32 %v921, %v1010
  %v1012 = vpop.f32.mrf.mxu0
  %v1013 = vadd.f32 %v921, %v1012
  %1014 = vmatmul.bf16.gmra.mxu0 %v878
  %v1015 = vpop.f32.mrf.mxu0
  %v1016 = vadd.f32 %v921, %v1015
  %v1017 = vpop.f32.mrf.mxu0
  %v1018 = vadd.f32 %v921, %v1017
  %1019 = vmatmul.bf16.gmra.mxu0 %v879
  %v1020 = vpop.f32.mrf.mxu0
  %v1021 = vadd.f32 %v921, %v1020
  %v1022 = vpop.f32.mrf.mxu0
  %v1023 = vadd.f32 %v921, %v1022
  %1024 = vmatmul.bf16.gmra.mxu0 %v880
  %v1025 = vpop.f32.mrf.mxu0
  %v1026 = vadd.f32 %v921, %v1025
  %v1027 = vpop.f32.mrf.mxu0
  %v1028 = vadd.f32 %v921, %v1027
  %1029 = vmatmul.bf16.gmra.mxu0 %v881
  %v1030 = vpop.f32.mrf.mxu0
  %v1031 = vadd.f32 %v921, %v1030
  %v1032 = vpop.f32.mrf.mxu0
  %v1033 = vadd.f32 %v921, %v1032
  %1034 = vmatmul.bf16.gmra.mxu0 %v882
  %v1035 = vpop.f32.mrf.mxu0
  %v1036 = vadd.f32 %v921, %v1035
  %v1037 = vpop.f32.mrf.mxu0
  %v1038 = vadd.f32 %v921, %v1037
  %1039 = vmatmul.bf16.gmra.mxu0 %v883
  %v1040 = vpop.f32.mrf.mxu0
  %v1041 = vadd.f32 %v921, %v1040
  %v1042 = vpop.f32.mrf.mxu0
  %v1043 = vadd.f32 %v921, %v1042
  %1044 = vmatmul.bf16.gmra.mxu0 %v884
  %v1045 = vpop.f32.mrf.mxu0
  %v1046 = vadd.f32 %v921, %v1045
  %v1047 = vpop.f32.mrf.mxu0
  %v1048 = vadd.f32 %v921, %v1047
  %1049 = vmatmul.bf16.gmra.mxu0 %v885
  %v1050 = vpop.f32.mrf.mxu0
  %v1051 = vadd.f32 %v921, %v1050
  %v1052 = vpop.f32.mrf.mxu0
  %v1053 = vadd.f32 %v921, %v1052
  %1054 = vmatmul.bf16.gmra.mxu0 %v886
  %v1055 = vpop.f32.mrf.mxu0
  %v1056 = vadd.f32 %v921, %v1055
  %v1057 = vpop.f32.mrf.mxu0
  %v1058 = vadd.f32 %v921, %v1057
  %1059 = vmatmul.bf16.gmra.mxu0 %v887
  %v1060 = vpop.f32.mrf.mxu0
  %v1061 = vadd.f32 %v921, %v1060
  %v1062 = vpop.f32.mrf.mxu0
  %v1063 = vadd.f32 %v921, %v1062
  %1064 = vmatmul.bf16.gmra.mxu0 %v888
  %v1065 = vpop.f32.mrf.mxu0
  %v1066 = vadd.f32 %v921, %v1065
  %v1067 = vpop.f32.mrf.mxu0
  %v1068 = vadd.f32 %v921, %v1067
  %1069 = vmatmul.bf16.gmra.mxu0 %v889
  %v1070 = vpop.f32.mrf.mxu0
  %v1071 = vadd.f32 %v921, %v1070
  %v1072 = vpop.f32.mrf.mxu0
  %v1073 = vadd.f32 %v921, %v1072
  %1074 = vmatmul.bf16.gmra.mxu0 %v890
  %v1075 = vpop.f32.mrf.mxu0
  %v1076 = vadd.f32 %v921, %v1075
  %v1077 = vpop.f32.mrf.mxu0
  %v1078 = vadd.f32 %v921, %v1077
  %1079 = vmatmul.bf16.gmra.mxu0 %v891
  %v1080 = vpop.f32.mrf.mxu0
  %v1081 = vadd.f32 %v921, %v1080
  %v1082 = vpop.f32.mrf.mxu0
  %v1083 = vadd.f32 %v921, %v1082
  %1084 = vmatmul.bf16.gmra.mxu0 %v892
  %v1085 = vpop.f32.mrf.mxu0
  %v1086 = vadd.f32 %v921, %v1085
  %v1087 = vpop.f32.mrf.mxu0
  %v1088 = vadd.f32 %v921, %v1087
  %1089 = vmatmul.bf16.gmra.mxu0 %v893
  %v1090 = vpop.f32.mrf.mxu0
  %v1091 = vadd.f32 %v921, %v1090
  %v1092 = vpop.f32.mrf.mxu0
  %v1093 = vadd.f32 %v921, %v1092
  %1094 = vmatmul.bf16.gmra.mxu0 %v894
  %v1095 = vpop.f32.mrf.mxu0
  %v1096 = vadd.f32 %v921, %v1095
  %v1097 = vpop.f32.mrf.mxu0
  %v1098 = vadd.f32 %v921, %v1097
  %1099 = vmatmul.bf16.gmra.mxu0 %v895
  %v1100 = vpop.f32.mrf.mxu0
  %v1101 = vadd.f32 %v921, %v1100
  %v1102 = vpop.f32.mrf.mxu0
  %v1103 = vadd.f32 %v921, %v1102
  %1104 = vmatmul.bf16.gmra.mxu0 %v896
  %v1105 = vpop.f32.mrf.mxu0
  %v1106 = vadd.f32 %v921, %v1105
  %v1107 = vpop.f32.mrf.mxu0
  %v1108 = vadd.f32 %v921, %v1107
  %1109 = vmatmul.bf16.gmra.mxu0 %v897
  %v1110 = vpop.f32.mrf.mxu0
  %v1111 = vadd.f32 %v921, %v1110
  %v1112 = vpop.f32.mrf.mxu0
  %v1113 = vadd.f32 %v921, %v1112
  %1114 = vmatmul.bf16.gmra.mxu0 %v898
  %v1115 = vpop.f32.mrf.mxu0
  %v1116 = vadd.f32 %v921, %v1115
  %v1117 = vpop.f32.mrf.mxu0
  %v1118 = vadd.f32 %v921, %v1117
  %1119 = vmatmul.bf16.gmra.mxu0 %v899
  %v1120 = vpop.f32.mrf.mxu0
  %v1121 = vadd.f32 %v921, %v1120
  %v1122 = vpop.f32.mrf.mxu0
  %v1123 = vadd.f32 %v921, %v1122
  %1124 = vmatmul.bf16.gmra.mxu0 %v900
  %v1125 = vpop.f32.mrf.mxu0
  %v1126 = vadd.f32 %v921, %v1125
  %v1127 = vpop.f32.mrf.mxu0
  %v1128 = vadd.f32 %v921, %v1127
  %1129 = vmatmul.bf16.gmra.mxu0 %v901
  %v1130 = vpop.f32.mrf.mxu0
  %v1131 = vadd.f32 %v921, %v1130
  %v1132 = vpop.f32.mrf.mxu0
  %v1133 = vadd.f32 %v921, %v1132
  %1134 = vmatmul.bf16.gmra.mxu0 %v902
  %v1135 = vpop.f32.mrf.mxu0
  %v1136 = vadd.f32 %v921, %v1135
  %v1137 = vpop.f32.mrf.mxu0
  %v1138 = vadd.f32 %v921, %v1137
  %1139 = vdwg.mxu0
  %vm1140 = vcmask 130048
  %1141 = vst.msk [vmem:[%s7] sm:$0xff] %vm1140, %v981
  %1142 = vst.msk [vmem:[%s7 + $0x8] sm:$0xff] %vm1140, %v983
  %1143 = vst.msk [vmem:[%s7 + $0x10] sm:$0xff] %vm1140, %v986
  %1144 = vst.msk [vmem:[%s7 + $0x18] sm:$0xff] %vm1140, %v988
  %1145 = vst.msk [vmem:[%s7 + $0x20] sm:$0xff] %vm1140, %v991
  %1146 = vst.msk [vmem:[%s7 + $0x28] sm:$0xff] %vm1140, %v993
  %1147 = vst.msk [vmem:[%s7 + $0x30] sm:$0xff] %vm1140, %v996
  %1148 = vst.msk [vmem:[%s7 + $0x38] sm:$0xff] %vm1140, %v998
  %1149 = vst.msk [vmem:[%s7 + $0x40] sm:$0xff] %vm1140, %v1001
  %1150 = vst.msk [vmem:[%s7 + $0x48] sm:$0xff] %vm1140, %v1003
  %1151 = vst.msk [vmem:[%s7 + $0x50] sm:$0xff] %vm1140, %v1006
  %1152 = vst.msk [vmem:[%s7 + $0x58] sm:$0xff] %vm1140, %v1008
  %1153 = vst.msk [vmem:[%s7 + $0x60] sm:$0xff] %vm1140, %v1011
  %1154 = vst.msk [vmem:[%s7 + $0x68] sm:$0xff] %vm1140, %v1013
  %1155 = vst.msk [vmem:[%s7 + $0x70] sm:$0xff] %vm1140, %v1016
  %1156 = vst.msk [vmem:[%s7 + $0x78] sm:$0xff] %vm1140, %v1018
  %1157 = vst.msk [vmem:[%s7 + $0x80] sm:$0xff] %vm1140, %v1021
  %1158 = vst.msk [vmem:[%s7 + $0x88] sm:$0xff] %vm1140, %v1023
  %1159 = vst.msk [vmem:[%s7 + $0x90] sm:$0xff] %vm1140, %v1026
  %1160 = vst.msk [vmem:[%s7 + $0x98] sm:$0xff] %vm1140, %v1028
  %1161 = vst.msk [vmem:[%s7 + $0xa0] sm:$0xff] %vm1140, %v1031
  %1162 = vst.msk [vmem:[%s7 + $0xa8] sm:$0xff] %vm1140, %v1033
  %1163 = vst.msk [vmem:[%s7 + $0xb0] sm:$0xff] %vm1140, %v1036
  %1164 = vst.msk [vmem:[%s7 + $0xb8] sm:$0xff] %vm1140, %v1038
  %1165 = vst.msk [vmem:[%s7 + $0xc0] sm:$0xff] %vm1140, %v1041
  %1166 = vst.msk [vmem:[%s7 + $0xc8] sm:$0xff] %vm1140, %v1043
  %1167 = vst.msk [vmem:[%s7 + $0xd0] sm:$0xff] %vm1140, %v1046
  %1168 = vst.msk [vmem:[%s7 + $0xd8] sm:$0xff] %vm1140, %v1048
  %1169 = vst.msk [vmem:[%s7 + $0xe0] sm:$0xff] %vm1140, %v1051
  %1170 = vst.msk [vmem:[%s7 + $0xe8] sm:$0xff] %vm1140, %v1053
  %1171 = vst.msk [vmem:[%s7 + $0xf0] sm:$0xff] %vm1140, %v1056
  %1172 = vst.msk [vmem:[%s7 + $0xf8] sm:$0xff] %vm1140, %v1058
  %1173 = vst.msk [vmem:[%s7 + $0x100] sm:$0xff] %vm1140, %v1061
  %1174 = vst.msk [vmem:[%s7 + $0x108] sm:$0xff] %vm1140, %v1063
  %1175 = vst.msk [vmem:[%s7 + $0x110] sm:$0xff] %vm1140, %v1066
  %1176 = vst.msk [vmem:[%s7 + $0x118] sm:$0xff] %vm1140, %v1068
  %1177 = vst.msk [vmem:[%s7 + $0x120] sm:$0xff] %vm1140, %v1071
  %1178 = vst.msk [vmem:[%s7 + $0x128] sm:$0xff] %vm1140, %v1073
  %1179 = vst.msk [vmem:[%s7 + $0x130] sm:$0xff] %vm1140, %v1076
  %1180 = vst.msk [vmem:[%s7 + $0x138] sm:$0xff] %vm1140, %v1078
  %1181 = vst.msk [vmem:[%s7 + $0x140] sm:$0xff] %vm1140, %v1081
  %1182 = vst.msk [vmem:[%s7 + $0x148] sm:$0xff] %vm1140, %v1083
  %1183 = vst.msk [vmem:[%s7 + $0x150] sm:$0xff] %vm1140, %v1086
  %1184 = vst.msk [vmem:[%s7 + $0x158] sm:$0xff] %vm1140, %v1088
  %1185 = vst.msk [vmem:[%s7 + $0x160] sm:$0xff] %vm1140, %v1091
  %1186 = vst.msk [vmem:[%s7 + $0x168] sm:$0xff] %vm1140, %v1093
  %1187 = vst.msk [vmem:[%s7 + $0x170] sm:$0xff] %vm1140, %v1096
  %1188 = vst.msk [vmem:[%s7 + $0x178] sm:$0xff] %vm1140, %v1098
  %1189 = vst.msk [vmem:[%s7 + $0x180] sm:$0xff] %vm1140, %v1101
  %1190 = vst.msk [vmem:[%s7 + $0x188] sm:$0xff] %vm1140, %v1103
  %1191 = vst.msk [vmem:[%s7 + $0x190] sm:$0xff] %vm1140, %v1106
  %1192 = vst.msk [vmem:[%s7 + $0x198] sm:$0xff] %vm1140, %v1108
  %1193 = vst.msk [vmem:[%s7 + $0x1a0] sm:$0xff] %vm1140, %v1111
  %1194 = vst.msk [vmem:[%s7 + $0x1a8] sm:$0xff] %vm1140, %v1113
  %1195 = vst.msk [vmem:[%s7 + $0x1b0] sm:$0xff] %vm1140, %v1116
  %1196 = vst.msk [vmem:[%s7 + $0x1b8] sm:$0xff] %vm1140, %v1118
  %1197 = vst.msk [vmem:[%s7 + $0x1c0] sm:$0xff] %vm1140, %v1121
  %1198 = vst.msk [vmem:[%s7 + $0x1c8] sm:$0xff] %vm1140, %v1123
  %1199 = vst.msk [vmem:[%s7 + $0x1d0] sm:$0xff] %vm1140, %v1126
  %1200 = vst.msk [vmem:[%s7 + $0x1d8] sm:$0xff] %vm1140, %v1128
  %1201 = vst.msk [vmem:[%s7 + $0x1e0] sm:$0xff] %vm1140, %v1131
  %1202 = vst.msk [vmem:[%s7 + $0x1e8] sm:$0xff] %vm1140, %v1133
  %1203 = vst.msk [vmem:[%s7 + $0x1f0] sm:$0xff] %vm1140, %v1136
  %1204 = vst.msk [vmem:[%s7 + $0x1f8] sm:$0xff] %vm1140, %v1138
  // Predicated region
  $region30: #{tpu_custom_call.1} parent=0 // pred_check
    _
  $region31: #{tpu_custom_call.1} parent=0 // pred_check_branch
    %1206 = sbr.rel (0) target = $region33
  $region32: #{tpu_custom_call.1} parent=0 // pred_region
    _
  $region33: #{tpu_custom_call.1} parent=0 // pred_fallthru
    _
  // Predicated region
  $region34: #{tpu_custom_call.1} parent=0 // pred_check
    _
  $region35: #{tpu_custom_call.1} parent=0 // pred_check_branch
    %1208 = sbr.rel (0) target = $region37
  $region36: #{tpu_custom_call.1} parent=0 // pred_region
    _
  $region37: #{tpu_custom_call.1} parent=0 // pred_fallthru
    _

</llo_original>
